<compile_context>
chip_gen: v7x
topology: tpu7x:2x2x1
jax: 0.10.0
libtpu: 0.0.40
codegen_flags: <defaults>
</compile_context>

<pallas_src>
import functools
import math

import jax
import jax.numpy as jnp
from jax.experimental import pallas as pl
from jax.experimental.pallas import tpu as pltpu


def _gem_kernel(x_ref, p_ref, o_ref, acc_ref, *, eps, log_hw, tr, slice_p):
    """One grid step: row tile (axis 0, parallel) x spatial tile (axis 1, reduction)."""
    h = pl.program_id(1)

    @pl.when(h == 0)
    def _init():
        acc_ref[...] = jnp.zeros_like(acc_ref)

    # p is VMEM-resident (constant index_map => fetched once for the whole
    # grid); slice out this row tile's exponents when there are several tiles.
    if slice_p:
        start = pl.multiple_of(pl.program_id(0) * tr, tr)
        p = p_ref[pl.ds(start, tr), :]            # (tr, 1)
    else:
        p = p_ref[...]                            # (tr, 1) or (1, 1) broadcast

    # clamp(min=eps) then x**p == exp(p * log(x)), all in f32 (v5e has no bf16
    # VPU/EUP).  TODO(synk): optional bf16 log fast path for bf16 inputs on
    # v6e/v7x where the EUP (2 transcendentals/elem), not HBM, is the binding
    # slot — gated off by default since bf16 log near eps loses precision.
    xc = jnp.maximum(x_ref[...].astype(jnp.float32), eps)        # (tr, thw)
    acc_ref[...] += jnp.sum(jnp.exp(p * jnp.log(xc)), axis=-1, keepdims=True)

    @pl.when(h == pl.num_programs(1) - 1)
    def _finalize():
        # mean**(1/p) = exp((log(sum) - log(HW)) / p): folding the 1/HW of the
        # mean into the log keeps exactly 2 transcendentals per element plus
        # O(rows) finalization work.
        out = jnp.exp((jnp.log(acc_ref[...]) - log_hw) / p)
        # TODO(synk): lane-dense (1, tr) output layout (XLU transpose) once TR
        # is guaranteed 128-aligned; the (tr, 1) store only happens once per
        # row tile, so it is already off the steady-state inner-loop path.
        o_ref[...] = out.astype(o_ref.dtype)


def _divisors(n):
    ds = set()
    i = 1
    while i * i <= n:
        if n % i == 0:
            ds.add(i)
            ds.add(n // i)
        i += 1
    return sorted(ds)


def _choose_tiles(rows, hw, itemsize, block_bytes):
    """Pick (TR, THW) obeying the TPU layout rules by construction.

    TR  : sublane tile — a multiple of 8 dividing `rows` (or the full extent
          when none exists).  We keep >= 2 row tiles whenever possible so the
          'parallel' row axis can be sharded across both v7x TensorCores.
    THW : lane tile — a multiple of 128 dividing `hw` (or the full extent),
          sized so one x block stays within `block_bytes` (Pallas
          double-buffers it); the HW grid axis absorbs any overflow.
    """
    tr_cands = [d for d in _divisors(rows) if d % 8 == 0] or [rows]
    if len(tr_cands) > 1:
        tr_cands = [d for d in tr_cands if d < rows] or tr_cands

    fitting = [d for d in tr_cands if d * hw * itemsize <= block_bytes]
    tr = max(fitting) if fitting else min(tr_cands)

    if tr * hw * itemsize <= block_bytes:
        thw = hw
    else:
        max_thw = max(1, block_bytes // (tr * itemsize))
        lane_ok = [d for d in _divisors(hw) if d % 128 == 0 and d <= max_thw]
        # TODO(synk): mask a ragged last HW block in-kernel instead of falling
        # back to the full extent when HW has no 128-aligned divisor.
        thw = max(lane_ok) if lane_ok else hw
    return tr, thw


def gem_mp(x, p, eps=1e-6, *, block_bytes=4 * 1024 * 1024):
    """Generalized-mean pooling.  x: (N, C, H, W); p: (mp,), mp in {1, C}.

    Returns (N, C, 1, 1) = avg_pool2d(clamp(x, min=eps) ** p, (H, W)) ** (1/p).
    """
    N, C, H, W = x.shape
    mp = p.shape[0]
    assert mp in (1, C), "mp must be 1 or equal to the channel count"
    HW = H * W
    R = N * C

    x2 = x.reshape(R, HW)                           # free reshape, native dtype
    itemsize = x2.dtype.itemsize

    TR, THW = _choose_tiles(R, HW, itemsize, block_bytes)
    n_r, n_h = R // TR, HW // THW
    grid = (n_r, n_h)

    # Per-row exponent.  mp == C: tile the (C,) vector across the batch (a few
    # KiB of HBM) and keep it VMEM-resident via a constant index_map; mp == 1:
    # a single (1, 1) value broadcast in-kernel.
    if mp == C:
        p_arr = jnp.tile(p.astype(jnp.float32).reshape(C, 1), (N, 1))   # (R, 1)
    else:
        p_arr = p.astype(jnp.float32).reshape(1, 1)
    resident_p = (mp == 1) or (p_arr.size * 4 <= (1 << 20))
    if resident_p:
        p_spec = pl.BlockSpec(p_arr.shape, lambda r, h: (0, 0))
        slice_p = (mp == C) and n_r > 1
    else:   # huge N*C: fall back to one tiny p DMA per row tile
        p_spec = pl.BlockSpec((TR, 1), lambda r, h: (r, 0))
        slice_p = False

    # Explicit VMEM budget: double-buffered x stream + resident p + out blocks
    # + f32 accumulator, plus headroom.
    vmem_need = (2 * TR * THW * itemsize
                 + 2 * (p_arr.size if resident_p else TR) * 4
                 + 2 * TR * itemsize
                 + TR * 4)
    vmem_limit = int(min(max(vmem_need + (2 << 20), 8 << 20), 32 << 20))

    kernel = functools.partial(
        _gem_kernel,
        eps=float(eps),
        log_hw=float(math.log(HW)),
        tr=TR,
        slice_p=slice_p,
    )

    out = pl.pallas_call(
        kernel,
        out_shape=jax.ShapeDtypeStruct((R, 1), x.dtype),
        grid_spec=pltpu.PrefetchScalarGridSpec(
            num_scalar_prefetch=0,
            grid=grid,
            in_specs=[
                pl.BlockSpec((TR, THW), lambda r, h: (r, h)),
                p_spec,
            ],
            out_specs=pl.BlockSpec((TR, 1), lambda r, h: (r, 0)),
            scratch_shapes=[pltpu.VMEM((TR, 1), jnp.float32)],
        ),
        compiler_params=pltpu.CompilerParams(
            dimension_semantics=("parallel", "arbitrary"),
            vmem_limit_bytes=vmem_limit,
        ),
    )(x2, p_arr)

    return out.reshape(N, C, 1, 1)


def gem_ref(x, p, eps=1e-6):
    """Pure-JAX reference matching the PyTorch forward."""
    pe = p.reshape(-1, 1, 1)                        # (mp, 1, 1) vs (N, C, H, W)
    pooled = jnp.mean(jnp.maximum(x, eps) ** pe, axis=(-2, -1), keepdims=True)
    return pooled ** (1.0 / pe)


if __name__ == "__main__":
    key = jax.random.PRNGKey(0)
    k1, k2 = jax.random.split(key)

    # Case 1: module default GeMmp(p=3, mp=1) — single shared exponent.
    N, C, H, W = 2, 4, 16, 16
    x = jax.random.uniform(k1, (N, C, H, W), dtype=jnp.float32)
    p1 = jnp.ones((1,), dtype=jnp.float32) * 3.0
    out1 = jax.block_until_ready(gem_mp(x, p1, eps=1e-6))
    ref1 = gem_ref(x, p1, eps=1e-6)
    assert out1.shape == (N, C, 1, 1), out1.shape
    assert jnp.allclose(out1, ref1, atol=1e-4, rtol=1e-4), (
        float(jnp.max(jnp.abs(out1 - ref1))))

    # Case 2: per-channel exponents (mp == C).
    pc = jnp.array([2.0, 3.0, 4.0, 5.0], dtype=jnp.float32)
    out2 = jax.block_until_ready(gem_mp(x, pc, eps=1e-6))
    ref2 = gem_ref(x, pc, eps=1e-6)
    assert out2.shape == (N, C, 1, 1), out2.shape
    assert jnp.allclose(out2, ref2, atol=1e-4, rtol=1e-4), (
        float(jnp.max(jnp.abs(out2 - ref2))))

    # Case 3: shrink the per-block budget so a small shape exercises the
    # general paths — 2 'parallel' row tiles (v7x megacore), a 2-step HW
    # reduction axis with the f32 accumulator, and the resident-p row slice.
    N3, C3, H3, W3 = 1, 16, 16, 16
    x3 = jax.random.uniform(k2, (N3, C3, H3, W3), dtype=jnp.float32)
    p3 = jnp.linspace(2.0, 5.0, C3).astype(jnp.float32)
    out3 = jax.block_until_ready(gem_mp(x3, p3, eps=1e-6, block_bytes=4096))
    ref3 = gem_ref(x3, p3, eps=1e-6)
    assert out3.shape == (N3, C3, 1, 1), out3.shape
    assert jnp.allclose(out3, ref3, atol=1e-4, rtol=1e-4), (
        float(jnp.max(jnp.abs(out3 - ref3))))

    print("KERNEL_OK")
</pallas_src>

<mosaic_0001>
module attributes {stable_mosaic.version = 11 : i64} {
  func.func @_gem_kernel(%arg0: i32, %arg1: i32, %arg2: memref<8x256xf32, #tpu.memory_space<vmem>>, %arg3: memref<1x1xf32, #tpu.memory_space<vmem>>, %arg4: memref<8x1xf32, #tpu.memory_space<vmem>>, %arg5: memref<8x1xf32, #tpu.memory_space<vmem>>) attributes {dimension_semantics = [#tpu.dimension_semantics<parallel>, #tpu.dimension_semantics<arbitrary>], iteration_bounds = array<i64: 1, 1>, scalar_prefetch = 0 : i64, scratch_operands = 1 : i64, tpu.core_type = #tpu.core_type<tc>, window_params = [{transform_indices = @transform_0, window_bounds = array<i64: 8, 256>}, {pipeline_mode = #tpu.pipeline_mode<synchronous>, transform_indices = @transform_1, window_bounds = array<i64: 1, 1>}, {transform_indices = @transform_2, window_bounds = array<i64: 8, 1>}]} {
    %c0_i32 = arith.constant 0 : i32
    %0 = arith.cmpi eq, %arg1, %c0_i32 : i32
    %1 = arith.extui %0 : i1 to i32
    %c0_i32_0 = arith.constant 0 : i32
    %2 = arith.cmpi ne, %1, %c0_i32_0 : i32
    scf.if %2 {
      %cst_11 = arith.constant 0.000000e+00 : f32
      %19 = vector.broadcast %cst_11 : f32 to vector<8x1xf32>
      %c0_12 = arith.constant 0 : index
      %c0_13 = arith.constant 0 : index
      %20 = vector.load %arg5[%c0_12, %c0_13] : memref<8x1xf32, #tpu.memory_space<vmem>>, vector<8x1xf32>
      tpu.vector_store %arg5[%c0_12, %c0_13], %19 {strides = array<i32>} : memref<8x1xf32, #tpu.memory_space<vmem>>, vector<8x1xf32>,
    } else {
    }
    %c0 = arith.constant 0 : index
    %c0_1 = arith.constant 0 : index
    %3 = vector.load %arg3[%c0, %c0_1] : memref<1x1xf32, #tpu.memory_space<vmem>>, vector<1x1xf32>
    %c0_2 = arith.constant 0 : index
    %c0_3 = arith.constant 0 : index
    %4 = vector.load %arg2[%c0_2, %c0_3] : memref<8x256xf32, #tpu.memory_space<vmem>>, vector<8x256xf32>
    %cst = arith.constant 9.99999997E-7 : f32
    %5 = vector.broadcast %cst : f32 to vector<8x256xf32>
    %6 = arith.maximumf %4, %5 : vector<8x256xf32>
    %c0_4 = arith.constant 0 : index
    %c0_5 = arith.constant 0 : index
    %7 = vector.load %arg5[%c0_4, %c0_5] : memref<8x1xf32, #tpu.memory_space<vmem>>, vector<8x1xf32>
    %8 = math.log %6 : vector<8x256xf32>
    %9 = vector.broadcast %3 : vector<1x1xf32> to vector<8x256xf32>
    %10 = arith.mulf %9, %8 : vector<8x256xf32>
    %11 = math.exp %10 : vector<8x256xf32>
    %cst_6 = arith.constant dense<0.000000e+00> : vector<8xf32>
    %12 = vector.multi_reduction <add>, %11, %cst_6 [1] : vector<8x256xf32> to vector<8xf32>
    %13 = vector.shape_cast %12 : vector<8xf32> to vector<8x1xf32>
    %14 = arith.addf %7, %13 : vector<8x1xf32>
    %c0_7 = arith.constant 0 : index
    %c0_8 = arith.constant 0 : index
    %15 = vector.load %arg5[%c0_7, %c0_8] : memref<8x1xf32, #tpu.memory_space<vmem>>, vector<8x1xf32>
    tpu.vector_store %arg5[%c0_7, %c0_8], %14 {strides = array<i32>} : memref<8x1xf32, #tpu.memory_space<vmem>>, vector<8x1xf32>,
    %c0_i32_9 = arith.constant 0 : i32
    %16 = arith.cmpi eq, %arg1, %c0_i32_9 : i32
    %17 = arith.extui %16 : i1 to i32
    %c0_i32_10 = arith.constant 0 : i32
    %18 = arith.cmpi ne, %17, %c0_i32_10 : i32
    scf.if %18 {
      %c0_11 = arith.constant 0 : index
      %c0_12 = arith.constant 0 : index
      %19 = vector.load %arg5[%c0_11, %c0_12] : memref<8x1xf32, #tpu.memory_space<vmem>>, vector<8x1xf32>
      %20 = math.log %19 : vector<8x1xf32>
      %cst_13 = arith.constant 5.54517746 : f32
      %21 = vector.broadcast %cst_13 : f32 to vector<8x1xf32>
      %22 = arith.subf %20, %21 : vector<8x1xf32>
      %23 = vector.broadcast %3 : vector<1x1xf32> to vector<8x1xf32>
      %24 = arith.divf %22, %23 : vector<8x1xf32>
      %25 = math.exp %24 : vector<8x1xf32>
      %c0_14 = arith.constant 0 : index
      %c0_15 = arith.constant 0 : index
      %26 = vector.load %arg4[%c0_14, %c0_15] : memref<8x1xf32, #tpu.memory_space<vmem>>, vector<8x1xf32>
      tpu.vector_store %arg4[%c0_14, %c0_15], %25 {strides = array<i32>} : memref<8x1xf32, #tpu.memory_space<vmem>>, vector<8x1xf32>,
    } else {
    }
    return
  }
  func.func @transform_0(%arg0: i32, %arg1: i32) -> (i32, i32) {
    %c0_i32 = arith.constant 0 : i32
    return %arg0, %arg1 : i32, i32
  }
  func.func @transform_1(%arg0: i32, %arg1: i32) -> (i32, i32) {
    %c0_i32 = arith.constant 0 : i32
    %c0_i32_0 = arith.constant 0 : i32
    %c0_i32_1 = arith.constant 0 : i32
    return %c0_i32, %c0_i32_0 : i32, i32
  }
  func.func @transform_2(%arg0: i32, %arg1: i32) -> (i32, i32) {
    %c0_i32 = arith.constant 0 : i32
    %c0_i32_0 = arith.constant 0 : i32
    return %arg0, %c0_i32 : i32, i32
  }
}

</mosaic_0001>

<llo_original>
// kernel: tpu_custom_call.1
$region0: #{tpu_custom_call.1}
  #allocation0 [shape = 'u32[]', space=smem, size = 0x4, offset = 0x4, fixed_abs, tag = 'smem constant byte address 0x4 - core index']
  #allocation1 [shape = 'u32[144,128]{1,0:T(1,128)}', space=vmem, size = 0x12000, scoped, tag = 'internal scratch']
  #allocation2 [shape = 'f32[8,1]{1,0:T(8,128)}', space=vmem, size = 0x1000, scoped, tag = 'scratch operand']
  #allocation3 [shape = 'f32[1,1]{1,0:T(1,128)S(1)}', space=vmem, size = 0x200, scoped, tag = 'scoped memory for tpu_custom_call.1']
  %s0 = inlined_call_operand.hbm [shape: f32[8,256], index: 0, kind: input, shape index: {}]
  %s1 = inlined_call_operand.<no memory space> [shape: f32[1,1], index: 1, kind: input, shape index: {}]
  %s2 = inlined_call_operand.vmem [shape: f32[8,1], index: 2, kind: output, shape index: {}]
  %s3 = sld [smem:[#allocation0]]
  $region30: #{tpu_custom_call.1} parent=0
    _
  %s5 = ssub.s32 1, %s3
  %s6 = scalar_select 0, %s5, %s3
  %v7 = vstv %s1
  %8 = vst [vmem:[#allocation3] sm:$0x1] %v7
  $region1: #{tpu_custom_call.1} parent=0
    #allocation4 [shape = 'u8[8192]{0}', space=vmem, size = 0x2000, scoped, tag = 'input window, operand 0, single buffered']
    #allocation5 [shape = 's32[1]{0}', space=sflag, size = 0x4, scoped, tag = 'scoped memory for tpu_custom_call.1']
    %9 = vsyncpa [#allocation5], 0
    // Predicated region
    $region2: #{tpu_custom_call.1} parent=1 // pred_check
      _
    $region3: #{tpu_custom_call.1} parent=1 // pred_check_branch
      %11 = sbr.rel (0) target = $region5
    $region4: #{tpu_custom_call.1} parent=1 // pred_region
      %s13 = ssub.s32 256, 256
      %14 = vsyncadd [#allocation5], %s13
      %s16 = sshll.u32 [#allocation4], 4
      %s17 = int_to_ptr.vmem [resolvable:$true] %s16
      %19 = dma.hbm_to_vmem [thread:$0]  %s0, 256, %s17, [#allocation5]
    $region5: #{tpu_custom_call.1} parent=1 // pred_fallthru
      _
    // Predicated region
    $region6: #{tpu_custom_call.1} parent=1 // pred_check
      _
    $region7: #{tpu_custom_call.1} parent=1 // pred_check_branch
      %21 = sbr.rel (0) target = $region9
    $region8: #{tpu_custom_call.1} parent=1 // pred_region
      _
    $region9: #{tpu_custom_call.1} parent=1 // pred_fallthru
      _
    // Predicated region
    $region10: #{tpu_custom_call.1} parent=1 // pred_check
      _
    $region11: #{tpu_custom_call.1} parent=1 // pred_check_branch
      %23 = sbr.rel (0) target = $region13
    $region12: #{tpu_custom_call.1} parent=1 // pred_region
      %24 = dma.done [#allocation5], 256
    $region13: #{tpu_custom_call.1} parent=1 // pred_fallthru
      _
    %p25 = scmp.eq.s32.totalorder 0, 0
    // Predicated region
    $region14: #{tpu_custom_call.1} parent=1 // pred_check
      %p26 = pneg %p25
    $region15: #{tpu_custom_call.1} parent=1 // pred_check_branch
      %28 = sbr.rel (%p26) target = $region17
    $region16: #{tpu_custom_call.1} parent=1 // pred_region
      %vm29 = vcmask 7168
      %30 = vst.msk [vmem:[#allocation2] sm:$0xff] %vm29, 0.0
    $region17: #{tpu_custom_call.1} parent=1 // pred_fallthru
      _
    %v31 = vld [vmem:[#allocation3] sm:$0x1]
    %v32 = vld [vmem:[#allocation4] sm:$0xff]
    %v33 = vld [vmem:[#allocation4 + $0x8] sm:$0xff]
    %v34 = vmax.f32 %v32, 1e-06
    %v35 = vmax.f32 %v33, 1e-06
    %v36 = vld [vmem:[#allocation2] sm:$0xff]
    %v37 = vlog2.pop %v34
    %v38 = vmul.f32 %v37, 0.6931472
    %v39 = vlog2.pop %v35
    %v40 = vmul.f32 %v39, 0.6931472
    %v42 = vlaneseq
    %v43 = vshrl.u32 %v42, 7
    %v44 = vsub.s32 0, %v43
    %v45 = vrot.slane %v31, %v44
    %46 = vset.pattern.permute.xlu0 0
    %47 = vperm.xlu0 %46, %v45
    %v48 = vpop.permute.xlu0 %47
    %v50 = vmul.f32 %v48, %v38
    %v51 = vmul.f32 %v48, %v40
    %v52 = vmul.f32 %v50, 1.442695
    %v53 = vpow.pop %v52
    %v54 = vmul.f32 %v51, 1.442695
    %v55 = vpow.pop %v54
    %v56 = vadd.f32 %v53, %v55
    %57 = vadd.xlane.f32.xlu0 %v56
    %v58 = vpop.xlane.xlu0 %57
    %v59 = vadd.f32 %v36, %v58
    %vm60 = vcmask 7168
    %61 = vst.msk [vmem:[#allocation2] sm:$0xff] %vm60, %v59
    // Predicated region
    $region18: #{tpu_custom_call.1} parent=1 // pred_check
      %p62 = pneg %p25
    $region19: #{tpu_custom_call.1} parent=1 // pred_check_branch
      %64 = sbr.rel (%p62) target = $region21
    $region20: #{tpu_custom_call.1} parent=1 // pred_region
      %v65 = vld [vmem:[#allocation2] sm:$0xff]
      %v66 = vlog2.pop %v65
      %v67 = vmul.f32 %v66, 0.6931472
      %v68 = vsub.f32 %v67, 5.5451775
      %v70 = vrcp.pop %v45
      %v71 = vmul.f32 %v68, %v70
      %v72 = vmul.f32 %v71, 1.442695
      %v73 = vpow.pop %v72
      %74 = vst.msk [vmem:[%s2] sm:$0xff] %vm60, %v73
    $region21: #{tpu_custom_call.1} parent=1 // pred_fallthru
      _
    // Predicated region
    $region22: #{tpu_custom_call.1} parent=1 // pred_check
      _
    $region23: #{tpu_custom_call.1} parent=1 // pred_check_branch
      %76 = sbr.rel (0) target = $region25
    $region24: #{tpu_custom_call.1} parent=1 // pred_region
      _
    $region25: #{tpu_custom_call.1} parent=1 // pred_fallthru
      _
    // Predicated region
    $region26: #{tpu_custom_call.1} parent=1 // pred_check
      _
    $region27: #{tpu_custom_call.1} parent=1 // pred_check_branch
      %78 = sbr.rel (0) target = $region29
    $region28: #{tpu_custom_call.1} parent=1 // pred_region
      _
    $region29: #{tpu_custom_call.1} parent=1 // pred_fallthru
      _
    %79 = vsyncpa [#allocation5], 1

</llo_original>
